<compile_context>
chip_gen: v7x
topology: tpu7x:2x2x1
jax: 0.10.0
libtpu: 0.0.40
codegen_flags: <defaults>
</compile_context>

<pallas_src>
import math
import functools

import jax
import jax.numpy as jnp
from jax.experimental import pallas as pl
from jax.experimental.pallas import tpu as pltpu


def _round_up(x, m):
    return (x + m - 1) // m * m


# ----------------------------- tiled linear (MXU) -----------------------------

def _matmul_kernel(x_ref, w_ref, o_ref, acc_ref):
    @pl.when(pl.program_id(2) == 0)
    def _():
        acc_ref[...] = jnp.zeros_like(acc_ref)

    acc_ref[...] += jnp.dot(x_ref[...], w_ref[...],
                            preferred_element_type=jnp.float32)

    @pl.when(pl.program_id(2) == pl.num_programs(2) - 1)
    def _():
        o_ref[...] = acc_ref[...].astype(o_ref.dtype)


def pallas_linear(x2d, wt, *, tm=512, tn=512, tk=512,
                  compute_dtype=None, out_dtype=None):
    """x2d: (M, K); wt: (K, N) (weights already pre-transposed once).
    Tiled/pipelined y = x2d @ wt on the MXU with an f32 VMEM accumulator.
    Set compute_dtype=jnp.bfloat16 for native MXU input width (all of
    v5e/v6e/v7x take bf16); f32 kept as the default for exact parity tests."""
    out_dtype = out_dtype or x2d.dtype
    if compute_dtype is not None:
        x2d = x2d.astype(compute_dtype)
        wt = wt.astype(compute_dtype)

    M, K = x2d.shape
    Kw, N = wt.shape
    assert K == Kw

    # Clamp tiles to the (aligned) problem size; keep sublane/lane legality.
    tm = min(tm, _round_up(M, 8))
    tk = min(tk, _round_up(K, 128))
    tn = min(tn, _round_up(N, 128))
    Mp, Kp, Np = _round_up(M, tm), _round_up(K, tk), _round_up(N, tn)

    if (Mp, Kp) != (M, K):
        x2d = jnp.pad(x2d, ((0, Mp - M), (0, Kp - K)))
    if (Kp, Np) != (K, N):
        wt = jnp.pad(wt, ((0, Kp - K), (0, Np - N)))

    out = pl.pallas_call(
        _matmul_kernel,
        out_shape=jax.ShapeDtypeStruct((Mp, Np), out_dtype),
        grid=(Mp // tm, Np // tn, Kp // tk),
        in_specs=[
            pl.BlockSpec((tm, tk), lambda i, j, k: (i, k)),
            pl.BlockSpec((tk, tn), lambda i, j, k: (k, j)),
        ],
        out_specs=pl.BlockSpec((tm, tn), lambda i, j, k: (i, j)),
        scratch_shapes=[pltpu.VMEM((tm, tn), jnp.float32)],
        compiler_params=pltpu.CompilerParams(
            dimension_semantics=("parallel", "parallel", "arbitrary")),
    )(x2d, wt)

    if (Mp, Np) != (M, N):
        out = out[:M, :N]
    return out


# ----------------------------- flash GQA attention -----------------------------

def _gqa_flash_kernel(q_ref, k_ref, v_ref, o_ref, m_sc, l_sc, acc_sc,
                      *, skv_total, tkv, tq, d, mask_last):
    kvi = pl.program_id(3)
    last = pl.num_programs(3) - 1

    @pl.when(kvi == 0)
    def _():
        m_sc[...] = jnp.full(m_sc.shape, -jnp.inf, jnp.float32)
        l_sc[...] = jnp.zeros_like(l_sc)
        acc_sc[...] = jnp.zeros_like(acc_sc)

    # Leading size-1 dims; reshape is layout-free.  1/sqrt(D) already folded
    # into the q projection weights, so no per-tile scale multiply here.
    q = q_ref[...].reshape(tq, d)
    k = k_ref[...].reshape(tkv, d)
    v = v_ref[...].reshape(tkv, d)

    # (tq, tkv) scores for this kv tile only — bounded VMEM/vreg footprint.
    s = jax.lax.dot_general(q, k, (((1,), (1,)), ((), ())),
                            preferred_element_type=jnp.float32)

    def update(s):
        m_new = jnp.maximum(m_sc[...], s.max(axis=-1, keepdims=True))
        alpha = jnp.exp(m_sc[...] - m_new)
        p = jnp.exp(s - m_new)
        l_sc[...] = alpha * l_sc[...] + p.sum(axis=-1, keepdims=True)
        acc_sc[...] = alpha * acc_sc[...] + jnp.dot(
            p.astype(v.dtype), v, preferred_element_type=jnp.float32)
        m_sc[...] = m_new

    if mask_last:
        # Static: padding can exist only in the final kv tile, so the iota /
        # compare / select work is gated out of the steady-state loop.
        @pl.when(kvi != last)
        def _():
            update(s)

        @pl.when(kvi == last)
        def _():
            kv_pos = kvi * tkv + jax.lax.broadcasted_iota(jnp.int32, s.shape, 1)
            update(jnp.where(kv_pos < skv_total, s, -jnp.inf))
    else:
        update(s)

    @pl.when(kvi == last)
    def _():
        # approx=True (EUP vrcp) is available if the accuracy budget allows;
        # kept exact here to hold the 1e-4 parity tolerance vs. the reference.
        inv_l = pl.reciprocal(l_sc[...], approx=False)
        o_ref[...] = (acc_sc[...] * inv_l).reshape(o_ref.shape).astype(o_ref.dtype)


def pallas_gqa_attention(q, k, v, num_query_groups, *,
                         q_block_target=256, kv_block_target=512):
    """q: (B, nH, S, D); k, v: (B, nKV, Skv, D). Returns (B, nH, S, D).
    Query head h uses kv head h // G (repeat_interleave semantics); the G query
    heads of each kv head are contiguous and are folded together, then the
    folded G*S query axis is tiled by tq so VMEM use is sequence-length
    independent.  NOTE: 1/sqrt(D) must already be folded into q."""
    B, nH, S, D = q.shape
    _, nKV, Skv, _ = k.shape
    assert Skv >= 1, "empty KV (Skv == 0) would make the softmax denominator 0"
    G = num_query_groups
    GS = G * S

    # Fold the G query heads per kv head: (B, nH, S, D) -> (B, nKV, G*S, D).
    qg = q.reshape(B, nKV, GS, D)

    # Query tile (multiple of 8 sublanes); pad GS up, garbage rows sliced off.
    tq = min(_round_up(q_block_target, 8), _round_up(GS, 8))
    GS_pad = _round_up(GS, tq)
    if GS_pad != GS:
        qg = jnp.pad(qg, ((0, 0), (0, 0), (0, GS_pad - GS), (0, 0)))

    # KV tile (multiple of 8 sublanes); pad Skv up and mask in-kernel (last
    # tile only).
    tkv = min(_round_up(kv_block_target, 8), _round_up(Skv, 8))
    Skv_pad = _round_up(Skv, tkv)
    if Skv_pad != Skv:
        pad = ((0, 0), (0, 0), (0, Skv_pad - Skv), (0, 0))
        k = jnp.pad(k, pad)
        v = jnp.pad(v, pad)

    kernel = functools.partial(_gqa_flash_kernel, skv_total=Skv, tkv=tkv,
                               tq=tq, d=D, mask_last=(Skv_pad != Skv))
    out = pl.pallas_call(
        kernel,
        out_shape=jax.ShapeDtypeStruct((B, nKV, GS_pad, D), q.dtype),
        grid=(B, nKV, GS_pad // tq, Skv_pad // tkv),
        in_specs=[
            pl.BlockSpec((1, 1, tq, D), lambda b, h, qi, c: (b, h, qi, 0)),
            pl.BlockSpec((1, 1, tkv, D), lambda b, h, qi, c: (b, h, c, 0)),
            pl.BlockSpec((1, 1, tkv, D), lambda b, h, qi, c: (b, h, c, 0)),
        ],
        out_specs=pl.BlockSpec((1, 1, tq, D), lambda b, h, qi, c: (b, h, qi, 0)),
        scratch_shapes=[
            pltpu.VMEM((tq, 1), jnp.float32),   # running max m
            pltpu.VMEM((tq, 1), jnp.float32),   # running sum l
            pltpu.VMEM((tq, D), jnp.float32),   # running output acc
        ],
        compiler_params=pltpu.CompilerParams(
            dimension_semantics=("parallel", "parallel", "parallel",
                                 "arbitrary")),
    )(qg, k, v)

    if GS_pad != GS:
        out = out[:, :, :GS, :]
    return out.reshape(B, nH, S, D)


# ----------------------------- JAX glue (RoPE etc.) -----------------------------

def rope_frequency_cache(d_model, max_seq_len, base):
    d = d_model // 2
    j = jnp.arange(0, d, dtype=jnp.float32)
    theta = 1.0 / (base ** (2.0 * j / d_model))
    m = jnp.arange(max_seq_len, dtype=jnp.float32)
    angles = m[:, None] * theta[None, :]
    return jnp.cos(angles), jnp.sin(angles)


def apply_rope_like_torch(x, cos_cached, sin_cached, offset):
    """Exactly mirrors RoPE.forward + apply_rope from the reference module: the
    angle index comes from x.shape[1] (the *head* axis here, since the module
    applies RoPE after the (1,2) transpose) and is broadcast over trailing
    non-feature axes.  Reproduced verbatim for bit-for-bit parity.
    # TODO(synk): confirm with the model owner — seq-indexed RoPE is almost
    # certainly the intent; fixing it would let RoPE fuse into the QKV kernel."""
    axis1_len = x.shape[1]
    cos = cos_cached[offset:offset + axis1_len]   # (axis1_len, d/2)
    sin = sin_cached[offset:offset + axis1_len]
    cos = cos[None, :, None, :]
    sin = sin[None, :, None, :]
    x_even = x[..., 0::2]
    x_odd = x[..., 1::2]
    re = x_even * cos - x_odd * sin
    ro = x_even * sin + x_odd * cos
    return jnp.stack([re, ro], axis=-1).reshape(x.shape)


class GroupedMultiQueryAttentionPallas:
    def __init__(self, hidden_dim, num_heads, num_kv_heads, max_seq_len,
                 rope_base, key, compute_dtype=None, attn_dtype=None,
                 q_block_target=256, kv_block_target=512):
        assert hidden_dim % num_heads == 0
        assert num_heads % num_kv_heads == 0
        self.hidden_dim = hidden_dim
        self.num_heads = num_heads
        self.num_kv_heads = num_kv_heads
        self.head_dim = hidden_dim // num_heads
        self.num_query_groups = num_heads // num_kv_heads
        self.max_seq_len = max_seq_len
        self.compute_dtype = compute_dtype     # bf16 on real hardware runs
        self.attn_dtype = attn_dtype           # bf16 q/k/v for attention (f32 math)
        self.q_block_target = q_block_target   # flash query tile (128-512 in prod)
        self.kv_block_target = kv_block_target # flash KV tile (256-512 in prod)

        kq, kk, kv, ko = jax.random.split(key, 4)
        bound = 1.0 / math.sqrt(hidden_dim)
        kv_out = num_kv_heads * self.head_dim
        # PyTorch Linear weight layout: (out_features, in_features)
        self.W_q = jax.random.uniform(kq, (hidden_dim, hidden_dim),
                                      jnp.float32, -bound, bound)
        self.W_k = jax.random.uniform(kk, (kv_out, hidden_dim),
                                      jnp.float32, -bound, bound)
        self.W_v = jax.random.uniform(kv, (kv_out, hidden_dim),
                                      jnp.float32, -bound, bound)
        self.W_o = jax.random.uniform(ko, (hidden_dim, hidden_dim),
                                      jnp.float32, -bound, bound)

        # Pre-transposed, fused QKV weight (built once; no per-call w.T).
        # 1/sqrt(head_dim) is folded into the q columns: RoPE is a rotation,
        # so scaling commutes through it and the scores come out pre-scaled.
        q_scale = 1.0 / math.sqrt(self.head_dim)
        self.Wqkv_t = jnp.concatenate(
            [self.W_q.T * q_scale, self.W_k.T, self.W_v.T],
            axis=1)                                           # (H, H + 2*kv_out)
        self.Wo_t = self.W_o.T                                # (H, H)

        self.cos_cached, self.sin_cached = rope_frequency_cache(
            self.head_dim, max_seq_len, rope_base)

    def __call__(self, x, offset=0, past_key_value=None):
        B, S, H = x.shape
        nH, nKV, Dh = self.num_heads, self.num_kv_heads, self.head_dim
        kv_out = nKV * Dh

        # Fused QKV projection: x2d read from HBM once, lane-dense output slab.
        x2d = x.reshape(B * S, H)
        qkv = pallas_linear(x2d, self.Wqkv_t, compute_dtype=self.compute_dtype)
        # TODO(synk): the head-split transposes + RoPE below still round-trip
        # HBM; with seq-indexed RoPE they could fuse into the projection kernel
        # (or the attention q/k load) and kill ~5 activation passes.
        q = qkv[:, :H].reshape(B, S, nH, Dh).transpose(0, 2, 1, 3)
        k = qkv[:, H:H + kv_out].reshape(B, S, nKV, Dh).transpose(0, 2, 1, 3)
        v = qkv[:, H + kv_out:].reshape(B, S, nKV, Dh).transpose(0, 2, 1, 3)

        q = apply_rope_like_torch(q, self.cos_cached, self.sin_cached, offset)
        k = apply_rope_like_torch(k, self.cos_cached, self.sin_cached, offset)

        if past_key_value is not None:
            cache_k, cache_v = past_key_value
            # TODO(synk): for decode, replace concatenate with a preallocated
            # cache updated in place (lax.dynamic_update_slice /
            # input_output_aliases) + scalar-prefetched valid length.
            k = jnp.concatenate([cache_k, k], axis=2)
            v = jnp.concatenate([cache_v, v], axis=2)
        current_key_value = (k, v)

        qa, ka, va = q, k, v
        if self.attn_dtype is not None:
            qa = qa.astype(self.attn_dtype)
            ka = ka.astype(self.attn_dtype)
            va = va.astype(self.attn_dtype)
        attn_out = pallas_gqa_attention(
            qa, ka, va, self.num_query_groups,
            q_block_target=self.q_block_target,
            kv_block_target=self.kv_block_target).astype(x.dtype)

        out = attn_out.transpose(0, 2, 1, 3).reshape(B * S, H)
        out = pallas_linear(out, self.Wo_t, compute_dtype=self.compute_dtype,
                            out_dtype=x.dtype).reshape(B, S, H)
        return out, current_key_value


# ----------------------------- reference (plain JAX) -----------------------------

def reference_forward(mod, x, offset=0, past_key_value=None):
    B, S, H = x.shape
    nH, nKV, Dh, G = mod.num_heads, mod.num_kv_heads, mod.head_dim, mod.num_query_groups
    q = (x @ mod.W_q.T).reshape(B, S, nH, Dh).transpose(0, 2, 1, 3)
    k = (x @ mod.W_k.T).reshape(B, S, nKV, Dh).transpose(0, 2, 1, 3)
    v = (x @ mod.W_v.T).reshape(B, S, nKV, Dh).transpose(0, 2, 1, 3)
    q = apply_rope_like_torch(q, mod.cos_cached, mod.sin_cached, offset)
    k = apply_rope_like_torch(k, mod.cos_cached, mod.sin_cached, offset)
    if past_key_value is not None:
        k = jnp.concatenate([past_key_value[0], k], axis=2)
        v = jnp.concatenate([past_key_value[1], v], axis=2)
    k_rep = jnp.repeat(k, G, axis=1)
    v_rep = jnp.repeat(v, G, axis=1)
    scores = jnp.einsum("bhqd,bhkd->bhqk", q, k_rep) / math.sqrt(Dh)
    w = jax.nn.softmax(scores, axis=-1)
    out = jnp.einsum("bhqk,bhkd->bhqd", w, v_rep)
    out = out.transpose(0, 2, 1, 3).reshape(B, S, H)
    return out @ mod.W_o.T, (k, v)


# ----------------------------- main -----------------------------

if __name__ == "__main__":
    batch, seq_len, hidden_dim = 2, 8, 32
    num_heads, num_kv_heads = 4, 2
    max_seq_len, rope_base = 16, 10000.0
    head_dim = hidden_dim // num_heads

    key = jax.random.PRNGKey(0)
    k_w, k_x, k_c1, k_c2 = jax.random.split(key, 4)
    # Deliberately tiny q/kv tiles so the multi-tile query axis AND the
    # multi-tile online-softmax kv axis are both exercised at toy sizes;
    # production defaults are 256 / 512.
    mod = GroupedMultiQueryAttentionPallas(
        hidden_dim, num_heads, num_kv_heads, max_seq_len, rope_base, k_w,
        compute_dtype=None, attn_dtype=None,
        q_block_target=8, kv_block_target=8)

    x = jax.random.normal(k_x, (batch, seq_len, hidden_dim), jnp.float32)

    # --- case 1: prompt (no KV cache) ---
    out, (k_cur, v_cur) = mod(x, offset=0, past_key_value=None)
    out = jax.block_until_ready(out)
    jax.block_until_ready(k_cur)
    jax.block_until_ready(v_cur)

    ref_out, (ref_k, ref_v) = reference_forward(mod, x, offset=0)
    assert out.shape == (batch, seq_len, hidden_dim)
    assert k_cur.shape == (batch, num_kv_heads, seq_len, head_dim)
    assert jnp.allclose(out, ref_out, atol=1e-4, rtol=1e-4)
    assert jnp.allclose(k_cur, ref_k, atol=1e-5, rtol=1e-5)
    assert jnp.allclose(v_cur, ref_v, atol=1e-5, rtol=1e-5)

    # --- case 2: with a KV cache whose length is not a tile multiple
    #     (exercises multi-tile online softmax + last-tile kv-padding mask) ---
    cache_len = 5
    cache_k = jax.random.normal(k_c1, (batch, num_kv_heads, cache_len, head_dim),
                                jnp.float32)
    cache_v = jax.random.normal(k_c2, (batch, num_kv_heads, cache_len, head_dim),
                                jnp.float32)
    out2, (k2, v2) = mod(x, offset=0, past_key_value=(cache_k, cache_v))
    out2 = jax.block_until_ready(out2)
    ref_out2, (ref_k2, ref_v2) = reference_forward(
        mod, x, offset=0, past_key_value=(cache_k, cache_v))
    assert k2.shape == (batch, num_kv_heads, cache_len + seq_len, head_dim)
    assert jnp.allclose(out2, ref_out2, atol=1e-4, rtol=1e-4)
    assert jnp.allclose(k2, ref_k2, atol=1e-5, rtol=1e-5)
    assert jnp.allclose(v2, ref_v2, atol=1e-5, rtol=1e-5)

    print("KERNEL_OK")
</pallas_src>

<mosaic_0001>
module attributes {stable_mosaic.version = 11 : i64} {
  func.func @_matmul_kernel(%arg0: i32, %arg1: i32, %arg2: i32, %arg3: memref<16x128xf32, #tpu.memory_space<vmem>>, %arg4: memref<128x128xf32, #tpu.memory_space<vmem>>, %arg5: memref<16x128xf32, #tpu.memory_space<vmem>>, %arg6: memref<16x128xf32, #tpu.memory_space<vmem>>) attributes {dimension_semantics = [#tpu.dimension_semantics<parallel>, #tpu.dimension_semantics<parallel>, #tpu.dimension_semantics<arbitrary>], iteration_bounds = array<i64: 1, 1, 1>, scalar_prefetch = 0 : i64, scratch_operands = 1 : i64, tpu.core_type = #tpu.core_type<tc>, window_params = [{transform_indices = @transform_0, window_bounds = array<i64: 16, 128>}, {transform_indices = @transform_1, window_bounds = array<i64: 128, 128>}, {transform_indices = @transform_2, window_bounds = array<i64: 16, 128>}]} {
    %c0_i32 = arith.constant 0 : i32
    %0 = arith.cmpi eq, %arg2, %c0_i32 : i32
    %1 = arith.extui %0 : i1 to i32
    %c0_i32_0 = arith.constant 0 : i32
    %2 = arith.cmpi ne, %1, %c0_i32_0 : i32
    scf.if %2 {
      %cst_10 = arith.constant 0.000000e+00 : f32
      %12 = vector.broadcast %cst_10 : f32 to vector<16x128xf32>
      %c0_11 = arith.constant 0 : index
      %c0_12 = arith.constant 0 : index
      %13 = vector.load %arg6[%c0_11, %c0_12] : memref<16x128xf32, #tpu.memory_space<vmem>>, vector<16x128xf32>
      tpu.vector_store %arg6[%c0_11, %c0_12], %12 {strides = array<i32>} : memref<16x128xf32, #tpu.memory_space<vmem>>, vector<16x128xf32>,
    } else {
    }
    %c0 = arith.constant 0 : index
    %c0_1 = arith.constant 0 : index
    %3 = vector.load %arg6[%c0, %c0_1] : memref<16x128xf32, #tpu.memory_space<vmem>>, vector<16x128xf32>
    %c0_2 = arith.constant 0 : index
    %c0_3 = arith.constant 0 : index
    %4 = vector.load %arg3[%c0_2, %c0_3] : memref<16x128xf32, #tpu.memory_space<vmem>>, vector<16x128xf32>
    %c0_4 = arith.constant 0 : index
    %c0_5 = arith.constant 0 : index
    %5 = vector.load %arg4[%c0_4, %c0_5] : memref<128x128xf32, #tpu.memory_space<vmem>>, vector<128x128xf32>
    %cst = arith.constant dense<0.000000e+00> : vector<16x128xf32>
    %6 = tpu.matmul %4, %5, %cst {dimension_numbers = #tpu.dot_dimension_numbers<[1], [0], [0], [1], [0, 0, 1, 1], [], []>} : vector<16x128xf32>, vector<128x128xf32>, vector<16x128xf32> -> vector<16x128xf32>
    %7 = arith.addf %3, %6 : vector<16x128xf32>
    %c0_6 = arith.constant 0 : index
    %c0_7 = arith.constant 0 : index
    %8 = vector.load %arg6[%c0_6, %c0_7] : memref<16x128xf32, #tpu.memory_space<vmem>>, vector<16x128xf32>
    tpu.vector_store %arg6[%c0_6, %c0_7], %7 {strides = array<i32>} : memref<16x128xf32, #tpu.memory_space<vmem>>, vector<16x128xf32>,
    %c0_i32_8 = arith.constant 0 : i32
    %9 = arith.cmpi eq, %arg2, %c0_i32_8 : i32
    %10 = arith.extui %9 : i1 to i32
    %c0_i32_9 = arith.constant 0 : i32
    %11 = arith.cmpi ne, %10, %c0_i32_9 : i32
    scf.if %11 {
      %c0_10 = arith.constant 0 : index
      %c0_11 = arith.constant 0 : index
      %12 = vector.load %arg6[%c0_10, %c0_11] : memref<16x128xf32, #tpu.memory_space<vmem>>, vector<16x128xf32>
      %c0_12 = arith.constant 0 : index
      %c0_13 = arith.constant 0 : index
      %13 = vector.load %arg5[%c0_12, %c0_13] : memref<16x128xf32, #tpu.memory_space<vmem>>, vector<16x128xf32>
      tpu.vector_store %arg5[%c0_12, %c0_13], %12 {strides = array<i32>} : memref<16x128xf32, #tpu.memory_space<vmem>>, vector<16x128xf32>,
    } else {
    }
    return
  }
  func.func @transform_0(%arg0: i32, %arg1: i32, %arg2: i32) -> (i32, i32) {
    %c0_i32 = arith.constant 0 : i32
    return %arg0, %arg2 : i32, i32
  }
  func.func @transform_1(%arg0: i32, %arg1: i32, %arg2: i32) -> (i32, i32) {
    %c0_i32 = arith.constant 0 : i32
    return %arg2, %arg1 : i32, i32
  }
  func.func @transform_2(%arg0: i32, %arg1: i32, %arg2: i32) -> (i32, i32) {
    %c0_i32 = arith.constant 0 : i32
    return %arg0, %arg1 : i32, i32
  }
}

</mosaic_0001>

<llo_original>
// kernel: tpu_custom_call.1
$region0: #{tpu_custom_call.1}
  #allocation0 [shape = 'u32[]', space=smem, size = 0x4, offset = 0x4, fixed_abs, tag = 'smem constant byte address 0x4 - core index']
  #allocation1 [shape = 'u32[144,128]{1,0:T(1,128)}', space=vmem, size = 0x12000, scoped, tag = 'internal scratch']
  #allocation2 [shape = 'f32[16,128]{1,0:T(8,128)}', space=vmem, size = 0x2000, scoped, tag = 'scratch operand']
  %s0 = inlined_call_operand.hbm [shape: f32[16,128], index: 0, kind: input, shape index: {}]
  %s1 = inlined_call_operand.hbm [shape: f32[128,128], index: 1, kind: input, shape index: {}]
  %s2 = inlined_call_operand.hbm [shape: f32[16,128], index: 2, kind: output, shape index: {}]
  %s3 = sld [smem:[#allocation0]]
  $region34: #{tpu_custom_call.1} parent=0
    _
  %s5 = ssub.s32 1, %s3
  %s6 = scalar_select 0, %s5, %s3
  $region1: #{tpu_custom_call.1} parent=0
    #allocation3 [shape = 'u8[8192]{0}', space=vmem, size = 0x2000, scoped, tag = 'input window, operand 0, single buffered']
    #allocation4 [shape = 's32[1]{0}', space=sflag, size = 0x4, scoped, tag = 'scoped memory for tpu_custom_call.1']
    #allocation5 [shape = 's32[1]{0}', space=sflag, size = 0x4, scoped, tag = 'scoped memory for tpu_custom_call.1']
    #allocation6 [shape = 'u8[65536]{0}', space=vmem, size = 0x10000, scoped, tag = 'input window, operand 1, single buffered']
    #allocation7 [shape = 's32[1]{0}', space=sflag, size = 0x4, scoped, tag = 'scoped memory for tpu_custom_call.1']
    #allocation8 [shape = 'u8[8192]{0}', space=vmem, size = 0x2000, scoped, tag = 'output window, operand 0, single buffered']
    %7 = vsyncpa [#allocation4], 0
    %8 = vsyncpa [#allocation7], 0
    %9 = vsyncpa [#allocation5], 0
    // Predicated region
    $region2: #{tpu_custom_call.1} parent=1 // pred_check
      _
    $region3: #{tpu_custom_call.1} parent=1 // pred_check_branch
      %11 = sbr.rel (0) target = $region5
    $region4: #{tpu_custom_call.1} parent=1 // pred_region
      %s13 = ssub.s32 256, 256
      %14 = vsyncadd [#allocation4], %s13
      %s15 = sshll.u32 [#allocation3], 4
      %s16 = int_to_ptr.vmem [resolvable:$true] %s15
      %21 = dma.hbm_to_vmem [thread:$0]  %s0, 256, %s16, [#allocation4], 128, 128, 8
    $region5: #{tpu_custom_call.1} parent=1 // pred_fallthru
      _
    // Predicated region
    $region6: #{tpu_custom_call.1} parent=1 // pred_check
      _
    $region7: #{tpu_custom_call.1} parent=1 // pred_check_branch
      %23 = sbr.rel (0) target = $region9
    $region8: #{tpu_custom_call.1} parent=1 // pred_region
      %s25 = ssub.s32 2048, 2048
      %26 = vsyncadd [#allocation7], %s25
      %s27 = sshll.u32 [#allocation6], 4
      %s28 = int_to_ptr.vmem [resolvable:$true] %s27
      %33 = dma.hbm_to_vmem [thread:$0]  %s1, 2048, %s28, [#allocation7], 128, 128, 8
    $region9: #{tpu_custom_call.1} parent=1 // pred_fallthru
      _
    // Predicated region
    $region10: #{tpu_custom_call.1} parent=1 // pred_check
      _
    $region11: #{tpu_custom_call.1} parent=1 // pred_check_branch
      %35 = sbr.rel (0) target = $region13
    $region12: #{tpu_custom_call.1} parent=1 // pred_region
      %36 = dma.done [#allocation4], 256
    $region13: #{tpu_custom_call.1} parent=1 // pred_fallthru
      _
    // Predicated region
    $region14: #{tpu_custom_call.1} parent=1 // pred_check
      _
    $region15: #{tpu_custom_call.1} parent=1 // pred_check_branch
      %38 = sbr.rel (0) target = $region17
    $region16: #{tpu_custom_call.1} parent=1 // pred_region
      %39 = dma.done [#allocation7], 2048
    $region17: #{tpu_custom_call.1} parent=1 // pred_fallthru
      _
    %p40 = scmp.eq.s32.totalorder 0, 0
    // Predicated region
    $region18: #{tpu_custom_call.1} parent=1 // pred_check
      %p41 = pneg %p40
    $region19: #{tpu_custom_call.1} parent=1 // pred_check_branch
      %43 = sbr.rel (%p41) target = $region21
    $region20: #{tpu_custom_call.1} parent=1 // pred_region
      %44 = vst [vmem:[#allocation2] sm:$0xff] 0.0
      %45 = vst [vmem:[#allocation2 + $0x8] sm:$0xff] 0.0
    $region21: #{tpu_custom_call.1} parent=1 // pred_fallthru
      _
    %v46 = vld [vmem:[#allocation2] sm:$0xff]
    %v47 = vld [vmem:[#allocation2 + $0x8] sm:$0xff]
    %v48 = vld [vmem:[#allocation3] sm:$0xff]
    %v49 = vld [vmem:[#allocation3 + $0x8] sm:$0xff]
    %v50 = vld [vmem:[#allocation6] sm:$0xff]
    %v51 = vld [vmem:[#allocation6 + $0x8] sm:$0xff]
    %v52 = vld [vmem:[#allocation6 + $0x10] sm:$0xff]
    %v53 = vld [vmem:[#allocation6 + $0x18] sm:$0xff]
    %v54 = vld [vmem:[#allocation6 + $0x20] sm:$0xff]
    %v55 = vld [vmem:[#allocation6 + $0x28] sm:$0xff]
    %v56 = vld [vmem:[#allocation6 + $0x30] sm:$0xff]
    %v57 = vld [vmem:[#allocation6 + $0x38] sm:$0xff]
    %v58 = vld [vmem:[#allocation6 + $0x40] sm:$0xff]
    %v59 = vld [vmem:[#allocation6 + $0x48] sm:$0xff]
    %v60 = vld [vmem:[#allocation6 + $0x50] sm:$0xff]
    %v61 = vld [vmem:[#allocation6 + $0x58] sm:$0xff]
    %v62 = vld [vmem:[#allocation6 + $0x60] sm:$0xff]
    %v63 = vld [vmem:[#allocation6 + $0x68] sm:$0xff]
    %v64 = vld [vmem:[#allocation6 + $0x70] sm:$0xff]
    %v65 = vld [vmem:[#allocation6 + $0x78] sm:$0xff]
    %66 = vmatprep.subr.mxu0 0.0
    %67 = vmatpush1.msra.mxu0 %v50
    %68 = vmatprep.subr.mxu0 0.0
    %69 = vmatpush1.msra.mxu0 %v51
    %70 = vmatprep.subr.mxu0 0.0
    %71 = vmatpush1.msra.mxu0 %v52
    %72 = vmatprep.subr.mxu0 0.0
    %73 = vmatpush1.msra.mxu0 %v53
    %74 = vmatprep.subr.mxu0 0.0
    %75 = vmatpush1.msra.mxu0 %v54
    %76 = vmatprep.subr.mxu0 0.0
    %77 = vmatpush1.msra.mxu0 %v55
    %78 = vmatprep.subr.mxu0 0.0
    %79 = vmatpush1.msra.mxu0 %v56
    %80 = vmatprep.subr.mxu0 0.0
    %81 = vmatpush1.msra.mxu0 %v57
    %82 = vmatprep.subr.mxu0 0.0
    %83 = vmatpush1.msra.mxu0 %v58
    %84 = vmatprep.subr.mxu0 0.0
    %85 = vmatpush1.msra.mxu0 %v59
    %86 = vmatprep.subr.mxu0 0.0
    %87 = vmatpush1.msra.mxu0 %v60
    %88 = vmatprep.subr.mxu0 0.0
    %89 = vmatpush1.msra.mxu0 %v61
    %90 = vmatprep.subr.mxu0 0.0
    %91 = vmatpush1.msra.mxu0 %v62
    %92 = vmatprep.subr.mxu0 0.0
    %93 = vmatpush1.msra.mxu0 %v63
    %94 = vmatprep.subr.mxu0 0.0
    %95 = vmatpush1.msra.mxu0 %v64
    %96 = vmatprep.subr.mxu0 0.0
    %97 = vmatpush1.msra.mxu0 %v65
    %98 = vmatprep.subr.mxu0 0.0
    %99 = vmatpush1.msra.mxu0 0.0
    %100 = vmatprep.subr.mxu0 0.0
    %101 = vmatpush1.msra.mxu0 0.0
    %102 = vmatprep.subr.mxu0 0.0
    %103 = vmatpush1.msra.mxu0 0.0
    %104 = vmatprep.subr.mxu0 0.0
    %105 = vmatpush1.msra.mxu0 0.0
    %106 = vmatprep.subr.mxu0 0.0
    %107 = vmatpush1.msra.mxu0 0.0
    %108 = vmatprep.subr.mxu0 0.0
    %109 = vmatpush1.msra.mxu0 0.0
    %110 = vmatprep.subr.mxu0 0.0
    %111 = vmatpush1.msra.mxu0 0.0
    %112 = vmatprep.subr.mxu0 0.0
    %113 = vmatpush1.msra.mxu0 0.0
    %114 = vmatprep.subr.mxu0 0.0
    %115 = vmatpush1.msra.mxu0 0.0
    %116 = vmatprep.subr.mxu0 0.0
    %117 = vmatpush1.msra.mxu0 0.0
    %118 = vmatprep.subr.mxu0 0.0
    %119 = vmatpush1.msra.mxu0 0.0
    %120 = vmatprep.subr.mxu0 0.0
    %121 = vmatpush1.msra.mxu0 0.0
    %122 = vmatprep.subr.mxu0 0.0
    %123 = vmatpush1.msra.mxu0 0.0
    %124 = vmatprep.subr.mxu0 0.0
    %125 = vmatpush1.msra.mxu0 0.0
    %126 = vmatprep.subr.mxu0 0.0
    %127 = vmatpush1.msra.mxu0 0.0
    %128 = vmatprep.subr.mxu0 0.0
    %129 = vmatpush1.msra.mxu0 0.0
    %130 = vmatprep.mubr.f32.mxu0 0.0
    %131 = vmatmul.mubr.f32.gmra.mrb[0].mxu0 %v48
    %v132 = vpop.f32.mrb[0].mxu0
    %v133 = vadd.f32 0.0, %v132
    %v134 = vpop.f32.mrb[0].mxu0
    %135 = vmatprep.mubr.f32.mxu0 0.0
    %136 = vmatmul.mubr.f32.gmra.mrb[0].mxu0 %v49
    %v137 = vpop.f32.mrb[0].mxu0
    %v138 = vadd.f32 0.0, %v137
    %v139 = vpop.f32.mrb[0].mxu0
    %140 = vdwg.mxu0
    %v141 = vadd.f32 %v46, %v133
    %v142 = vadd.f32 %v47, %v138
    %143 = vst [vmem:[#allocation2] sm:$0xff] %v141
    %144 = vst [vmem:[#allocation2 + $0x8] sm:$0xff] %v142
    // Predicated region
    $region22: #{tpu_custom_call.1} parent=1 // pred_check
      %p145 = pneg %p40
    $region23: #{tpu_custom_call.1} parent=1 // pred_check_branch
      %147 = sbr.rel (%p145) target = $region25
    $region24: #{tpu_custom_call.1} parent=1 // pred_region
      %v148 = vld [vmem:[#allocation2] sm:$0xff]
      %v149 = vld [vmem:[#allocation2 + $0x8] sm:$0xff]
      %150 = vst [vmem:[#allocation8] sm:$0xff] %v148
      %151 = vst [vmem:[#allocation8 + $0x8] sm:$0xff] %v149
    $region25: #{tpu_custom_call.1} parent=1 // pred_fallthru
      _
    // Predicated region
    $region26: #{tpu_custom_call.1} parent=1 // pred_check
      _
    $region27: #{tpu_custom_call.1} parent=1 // pred_check_branch
      %153 = sbr.rel (0) target = $region29
    $region28: #{tpu_custom_call.1} parent=1 // pred_region
      %s155 = ssub.s32 256, 256
      %156 = vsyncadd [#allocation5], %s155
      %s157 = sshll.u32 [#allocation8], 4
      %s158 = int_to_ptr.vmem [resolvable:$true] %s157
      %163 = dma.vmem_to_hbm [thread:$0]  %s158, 256, %s2, [#allocation5], 128, 128, 8
    $region29: #{tpu_custom_call.1} parent=1 // pred_fallthru
      _
    // Predicated region
    $region30: #{tpu_custom_call.1} parent=1 // pred_check
      _
    $region31: #{tpu_custom_call.1} parent=1 // pred_check_branch
      %165 = sbr.rel (0) target = $region33
    $region32: #{tpu_custom_call.1} parent=1 // pred_region
      %166 = dma.done [#allocation5], 256
    $region33: #{tpu_custom_call.1} parent=1 // pred_fallthru
      _
    %167 = vsyncpa [#allocation4], 1
    %168 = vsyncpa [#allocation7], 1
    %169 = vsyncpa [#allocation5], 1

</llo_original>
